<compile_context>
chip_gen: v5e
topology: v5e:2x2
jax: 0.10.0
libtpu: 0.0.40
codegen_flags: <defaults>
</compile_context>

<pallas_src>
import jax
import jax.numpy as jnp
from jax import lax
from jax.experimental import pallas as pl
from jax.experimental.pallas import tpu as pltpu


def _fused_kernel_nobias(x_ref, w1_ref, w2_ref, y_ref):
    # Fold the two weight matrices (nn-layout, no transposes needed):
    #   w_eff[D_out, D_in] = W2[D_out, H] . W1[H, D_in]   (contract H)
    w_eff = lax.dot_general(
        w2_ref[...], w1_ref[...],
        dimension_numbers=(((1,), (0,)), ((), ())),
        preferred_element_type=jnp.float32,
    )
    #   y[B, D_out] = x[B, D_in] . w_eff[D_out, D_in]     (contract D_in)
    y = lax.dot_general(
        x_ref[...], w_eff,
        dimension_numbers=(((1,), (1,)), ((), ())),
        preferred_element_type=jnp.float32,
    )
    y_ref[...] = y.astype(y_ref.dtype)


def _fused_kernel_bias(x_ref, w1_ref, w2_ref, b1_ref, b2_ref, y_ref):
    w_eff = lax.dot_general(
        w2_ref[...], w1_ref[...],
        dimension_numbers=(((1,), (0,)), ((), ())),
        preferred_element_type=jnp.float32,
    )
    # Effective bias: b_eff[1, D_out] = b1[1, H] . W2[D_out, H].T + b2
    b_eff = lax.dot_general(
        b1_ref[...], w2_ref[...],
        dimension_numbers=(((1,), (1,)), ((), ())),
        preferred_element_type=jnp.float32,
    ) + b2_ref[...]
    y = lax.dot_general(
        x_ref[...], w_eff,
        dimension_numbers=(((1,), (1,)), ((), ())),
        preferred_element_type=jnp.float32,
    )
    y_ref[...] = (y + b_eff).astype(y_ref.dtype)


def linear_model_dfa_forward(x, W1, W2, b1=None, b2=None, *, block_batch=512):
    """Forward pass of LinearModel_DFA.

    x  : [B, input_shape]
    W1 : [hidden_units, input_shape]   (PyTorch nn-style layout)
    W2 : [output_shape, hidden_units]
    b1 : [hidden_units] or None
    b2 : [output_shape] or None
    """
    B, D_in = x.shape
    H, D_in2 = W1.shape
    assert D_in == D_in2
    D_out, H2 = W2.shape
    assert H == H2

    # Batch tiling: stream x/y in tm-row blocks when B is large (enables the
    # auto double-buffered pipeline); single full block otherwise.
    tm = B if B <= block_batch else block_batch
    if tm != B and (B % tm != 0 or tm % 8 != 0):
        tm = B  # keep it simple: full-array block when B doesn't tile cleanly

    grid = (pl.cdiv(B, tm),)
    x_spec = pl.BlockSpec((tm, D_in), lambda i: (i, 0))
    w1_spec = pl.BlockSpec((H, D_in), lambda i: (0, 0))
    w2_spec = pl.BlockSpec((D_out, H), lambda i: (0, 0))
    y_spec = pl.BlockSpec((tm, D_out), lambda i: (i, 0))

    use_bias = (b1 is not None) or (b2 is not None)
    if not use_bias:
        kernel = _fused_kernel_nobias
        in_specs = [x_spec, w1_spec, w2_spec]
        args = (x, W1, W2)
    else:
        b1v = (jnp.zeros((1, H), x.dtype) if b1 is None
               else b1.reshape(1, H).astype(x.dtype))
        b2v = (jnp.zeros((1, D_out), x.dtype) if b2 is None
               else b2.reshape(1, D_out).astype(x.dtype))
        kernel = _fused_kernel_bias
        in_specs = [x_spec, w1_spec, w2_spec,
                    pl.BlockSpec((1, H), lambda i: (0, 0)),
                    pl.BlockSpec((1, D_out), lambda i: (0, 0))]
        args = (x, W1, W2, b1v, b2v)

    return pl.pallas_call(
        kernel,
        out_shape=jax.ShapeDtypeStruct((B, D_out), x.dtype),
        grid=grid,
        in_specs=in_specs,
        out_specs=y_spec,
        compiler_params=pltpu.CompilerParams(
            dimension_semantics=("parallel",)),
    )(*args)


if __name__ == "__main__":
    # Deterministic parameter / input construction (mirrors torch.randn inits).
    batch = 8
    input_shape = 32
    hidden_units = 64
    output_shape = 16

    key = jax.random.PRNGKey(0)
    kx, kw1, kw2, kb1, kb2 = jax.random.split(key, 5)

    x = jax.random.normal(kx, (batch, input_shape), dtype=jnp.float32)
    W1 = jax.random.normal(kw1, (hidden_units, input_shape), dtype=jnp.float32)
    W2 = jax.random.normal(kw2, (output_shape, hidden_units), dtype=jnp.float32)
    # TODO(synk): B1/B2 feedback matrices and the error list `e` are DFA
    # backward-only state; they play no role in the forward pass.

    # Default module path: use_bias=False.
    y = linear_model_dfa_forward(x, W1, W2)
    jax.block_until_ready(y)
    y_ref = (x @ W1.T) @ W2.T
    assert y.shape == (batch, output_shape)
    assert jnp.allclose(y, y_ref, rtol=1e-4, atol=1e-4)

    # use_bias=True variant (torch initializes biases to zero; use nonzero
    # values here to actually exercise the bias kernel).
    b1 = jax.random.normal(kb1, (hidden_units,), dtype=jnp.float32)
    b2 = jax.random.normal(kb2, (output_shape,), dtype=jnp.float32)
    yb = linear_model_dfa_forward(x, W1, W2, b1, b2)
    jax.block_until_ready(yb)
    yb_ref = (x @ W1.T + b1) @ W2.T + b2
    assert jnp.allclose(yb, yb_ref, rtol=1e-4, atol=1e-4)

    print("KERNEL_OK")
</pallas_src>

<mosaic_0001>
module attributes {stable_mosaic.version = 11 : i64} {
  func.func @_fused_kernel_nobias(%arg0: i32, %arg1: memref<8x32xf32, #tpu.memory_space<vmem>>, %arg2: memref<64x32xf32, #tpu.memory_space<vmem>>, %arg3: memref<16x64xf32, #tpu.memory_space<vmem>>, %arg4: memref<8x16xf32, #tpu.memory_space<vmem>>) attributes {dimension_semantics = [#tpu.dimension_semantics<parallel>], iteration_bounds = array<i64: 1>, scalar_prefetch = 0 : i64, scratch_operands = 0 : i64, tpu.core_type = #tpu.core_type<tc>, window_params = [{transform_indices = @transform_0, window_bounds = array<i64: 8, 32>}, {pipeline_mode = #tpu.pipeline_mode<synchronous>, transform_indices = @transform_1, window_bounds = array<i64: 64, 32>}, {pipeline_mode = #tpu.pipeline_mode<synchronous>, transform_indices = @transform_2, window_bounds = array<i64: 16, 64>}, {transform_indices = @transform_3, window_bounds = array<i64: 8, 16>}]} {
    %c0 = arith.constant 0 : index
    %c0_0 = arith.constant 0 : index
    %0 = vector.load %arg3[%c0, %c0_0] : memref<16x64xf32, #tpu.memory_space<vmem>>, vector<16x64xf32>
    %c0_1 = arith.constant 0 : index
    %c0_2 = arith.constant 0 : index
    %1 = vector.load %arg2[%c0_1, %c0_2] : memref<64x32xf32, #tpu.memory_space<vmem>>, vector<64x32xf32>
    %cst = arith.constant dense<0.000000e+00> : vector<16x32xf32>
    %2 = tpu.matmul %0, %1, %cst {dimension_numbers = #tpu.dot_dimension_numbers<[1], [0], [0], [1], [0, 0, 1, 1], [], []>} : vector<16x64xf32>, vector<64x32xf32>, vector<16x32xf32> -> vector<16x32xf32>
    %c0_3 = arith.constant 0 : index
    %c0_4 = arith.constant 0 : index
    %3 = vector.load %arg1[%c0_3, %c0_4] : memref<8x32xf32, #tpu.memory_space<vmem>>, vector<8x32xf32>
    %cst_5 = arith.constant dense<0.000000e+00> : vector<8x16xf32>
    %4 = tpu.matmul %3, %2, %cst_5 {dimension_numbers = #tpu.dot_dimension_numbers<[1], [1], [0], [0], [0, 0, 1, 0], [], []>} : vector<8x32xf32>, vector<16x32xf32>, vector<8x16xf32> -> vector<8x16xf32>
    %c0_6 = arith.constant 0 : index
    %c0_7 = arith.constant 0 : index
    %5 = vector.load %arg4[%c0_6, %c0_7] : memref<8x16xf32, #tpu.memory_space<vmem>>, vector<8x16xf32>
    tpu.vector_store %arg4[%c0_6, %c0_7], %4 {strides = array<i32>} : memref<8x16xf32, #tpu.memory_space<vmem>>, vector<8x16xf32>,
    return
  }
  func.func @transform_0(%arg0: i32) -> (i32, i32) {
    %c0_i32 = arith.constant 0 : i32
    %c0_i32_0 = arith.constant 0 : i32
    return %arg0, %c0_i32 : i32, i32
  }
  func.func @transform_1(%arg0: i32) -> (i32, i32) {
    %c0_i32 = arith.constant 0 : i32
    %c0_i32_0 = arith.constant 0 : i32
    %c0_i32_1 = arith.constant 0 : i32
    return %c0_i32, %c0_i32_0 : i32, i32
  }
  func.func @transform_2(%arg0: i32) -> (i32, i32) {
    %c0_i32 = arith.constant 0 : i32
    %c0_i32_0 = arith.constant 0 : i32
    %c0_i32_1 = arith.constant 0 : i32
    return %c0_i32, %c0_i32_0 : i32, i32
  }
  func.func @transform_3(%arg0: i32) -> (i32, i32) {
    %c0_i32 = arith.constant 0 : i32
    %c0_i32_0 = arith.constant 0 : i32
    return %arg0, %c0_i32 : i32, i32
  }
}

</mosaic_0001>

<llo_original>
// kernel: tpu_custom_call.1
$region0: #{tpu_custom_call.1}
  #allocation0 [shape = 'u32[]', space=smem, size = 0x4, offset = 0x4, fixed_abs, tag = 'smem constant byte address 0x4 - core index']
  #allocation1 [shape = 'u32[72,128]{1,0:T(1,128)}', space=vmem, size = 0x9000, scoped, tag = 'internal scratch']
  %s0 = inlined_call_operand.vmem [shape: f32[8,32], index: 0, kind: input, shape index: {}]
  %s1 = inlined_call_operand.vmem [shape: f32[64,32], index: 1, kind: input, shape index: {}]
  %s2 = inlined_call_operand.vmem [shape: f32[16,64], index: 2, kind: input, shape index: {}]
  %s3 = inlined_call_operand.hbm [shape: f32[8,16], index: 3, kind: output, shape index: {}]
  %s4 = sld [smem:[#allocation0]]
  $region22: #{tpu_custom_call.1} parent=0
    _
  %s6 = ssub.s32 1, %s4
  %s7 = scalar_select 0, %s6, %s4
  $region1: #{tpu_custom_call.1} parent=0
    #allocation2 [shape = 'u8[4096]{0}', space=vmem, size = 0x1000, scoped, tag = 'output window, operand 0, single buffered']
    #allocation3 [shape = 's32[1]{0}', space=sflag, size = 0x4, scoped, tag = 'scoped memory for tpu_custom_call.1']
    %8 = vsyncpa [#allocation3], 0
    // Predicated region
    $region2: #{tpu_custom_call.1} parent=1 // pred_check
      _
    $region3: #{tpu_custom_call.1} parent=1 // pred_check_branch
      %10 = sbr.rel (0) target = $region5
    $region4: #{tpu_custom_call.1} parent=1 // pred_region
      _
    $region5: #{tpu_custom_call.1} parent=1 // pred_fallthru
      _
    // Predicated region
    $region6: #{tpu_custom_call.1} parent=1 // pred_check
      _
    $region7: #{tpu_custom_call.1} parent=1 // pred_check_branch
      %12 = sbr.rel (0) target = $region9
    $region8: #{tpu_custom_call.1} parent=1 // pred_region
      _
    $region9: #{tpu_custom_call.1} parent=1 // pred_fallthru
      _
    // Predicated region
    $region10: #{tpu_custom_call.1} parent=1 // pred_check
      _
    $region11: #{tpu_custom_call.1} parent=1 // pred_check_branch
      %14 = sbr.rel (0) target = $region13
    $region12: #{tpu_custom_call.1} parent=1 // pred_region
      _
    $region13: #{tpu_custom_call.1} parent=1 // pred_fallthru
      _
    %v15 = vld [vmem:[%s2] sm:$0xff]
    %v16 = vld [vmem:[%s2 + $0x8] sm:$0xff]
    %v17 = vld [vmem:[%s1] sm:$0xff]
    %v18 = vld [vmem:[%s1 + $0x8] sm:$0xff]
    %v19 = vld [vmem:[%s1 + $0x10] sm:$0xff]
    %v20 = vld [vmem:[%s1 + $0x18] sm:$0xff]
    %v21 = vld [vmem:[%s1 + $0x20] sm:$0xff]
    %v22 = vld [vmem:[%s1 + $0x28] sm:$0xff]
    %v23 = vld [vmem:[%s1 + $0x30] sm:$0xff]
    %v24 = vld [vmem:[%s1 + $0x38] sm:$0xff]
    %vm25 = vcmask 523264
    %v27 = vsel %vm25, %v15, 0
    %v30 = vsel %vm25, %v16, 0
    %32 = vmatpush.msra.mxu0 0.0
    %33 = vmatpush.msra.mxu0 0.0
    %34 = vmatpush.msra.mxu0 0.0
    %35 = vmatpush.msra.mxu0 0.0
    %36 = vmatpush.msra.mxu0 0.0
    %37 = vmatpush.msra.mxu0 0.0
    %38 = vmatpush.msra.mxu0 0.0
    %39 = vmatpush.msra.mxu0 0.0
    %40 = vmatpush.msra.mxu0 %v24
    %41 = vmatpush.msra.mxu0 %v23
    %42 = vmatpush.msra.mxu0 %v22
    %43 = vmatpush.msra.mxu0 %v21
    %44 = vmatpush.msra.mxu0 %v20
    %45 = vmatpush.msra.mxu0 %v19
    %46 = vmatpush.msra.mxu0 %v18
    %47 = vmatpush.msra.mxu0 %v17
    %48 = vmatmul.f32.gmra.mxu0 %v27
    %v49 = vpop.f32.mrf.mxu0
    %v50 = vadd.f32 0.0, %v49
    %51 = vmatmul.f32.gmra.mxu0 %v30
    %v52 = vpop.f32.mrf.mxu0
    %v53 = vadd.f32 0.0, %v52
    %54 = vdwg.mxu0
    %v55 = vld [vmem:[%s0] sm:$0xff]
    %vm56 = vcmask 261120
    %v58 = vsel %vm56, %v55, 0
    %v61 = vsel %vm56, %v50, 0
    %v64 = vsel %vm56, %v53, 0
    %66 = vmatpush.xpose.msra.mxu0 0.0
    %67 = vmatpush.xpose.msra.mxu0 0.0
    %68 = vmatpush.xpose.msra.mxu0 0.0
    %69 = vmatpush.xpose.msra.mxu0 0.0
    %70 = vmatpush.xpose.msra.mxu0 0.0
    %71 = vmatpush.xpose.msra.mxu0 0.0
    %72 = vmatpush.xpose.msra.mxu0 0.0
    %73 = vmatpush.xpose.msra.mxu0 0.0
    %74 = vmatpush.xpose.msra.mxu0 0.0
    %75 = vmatpush.xpose.msra.mxu0 0.0
    %76 = vmatpush.xpose.msra.mxu0 0.0
    %77 = vmatpush.xpose.msra.mxu0 0.0
    %78 = vmatpush.xpose.msra.mxu0 0.0
    %79 = vmatpush.xpose.msra.mxu0 0.0
    %80 = vmatpush.xpose.msra.mxu0 %v64
    %81 = vmatpush.xpose.msra.mxu0 %v61
    %82 = vmatmul.f32.gmra.mxu0 %v58
    %v83 = vpop.f32.mrf.mxu0
    %v84 = vadd.f32 0.0, %v83
    %85 = vdwg.mxu0
    %vm86 = vcmask 130048
    %87 = vst.msk [vmem:[#allocation2] sm:$0xff] %vm86, %v84
    // Predicated region
    $region14: #{tpu_custom_call.1} parent=1 // pred_check
      _
    $region15: #{tpu_custom_call.1} parent=1 // pred_check_branch
      %89 = sbr.rel (0) target = $region17
    $region16: #{tpu_custom_call.1} parent=1 // pred_region
      %91 = vsyncadd [#allocation3], 0
      %s93 = sshll.u32 [#allocation2], 4
      %s94 = int_to_ptr.vmem [resolvable:$true] %s93
      %s95 = sshll.u32 %s3, 4
      %s96 = int_to_ptr.hbm [resolvable:$true] %s95
      %98 = dma.vmem_to_hbm [thread:$0]  %s94, 128, %s96, [#allocation3]
    $region17: #{tpu_custom_call.1} parent=1 // pred_fallthru
      _
    // Predicated region
    $region18: #{tpu_custom_call.1} parent=1 // pred_check
      _
    $region19: #{tpu_custom_call.1} parent=1 // pred_check_branch
      %100 = sbr.rel (0) target = $region21
    $region20: #{tpu_custom_call.1} parent=1 // pred_region
      %102 = dma.done [#allocation3], 128
    $region21: #{tpu_custom_call.1} parent=1 // pred_fallthru
      _
    %103 = vsyncpa [#allocation3], 1

</llo_original>
